<compile_context>
chip_gen: v6e
topology: v6e:2x2x1
jax: 0.10.0
libtpu: 0.0.40
codegen_flags: <defaults>
</compile_context>

<pallas_src>
import math

import jax
import jax.numpy as jnp
from jax.experimental import pallas as pl
from jax.experimental.pallas import tpu as pltpu


# ---------------------------------------------------------------------------
# Planning helpers (generation / dtype aware VMEM policy)
# ---------------------------------------------------------------------------
def _rup(a, m):
    return ((a + m - 1) // m) * m


def _vmem_capacity_bytes():
    """Per-core VMEM capacity; conservative 64 MiB (v7x) fallback."""
    try:
        info = pltpu.get_tpu_info()
        cap = getattr(info, "vmem_capacity_bytes", None)
        if cap:
            return int(cap)
    except Exception:
        pass
    return 64 << 20


def _vmem_estimate(B, Cin, Cout, V, R, tile_v, lap_dtype):
    """Padded VMEM footprint of the R>1 kernel (double-buffered blocks)."""
    BC, BO = B * Cin, B * Cout
    lb = jnp.dtype(lap_dtype).itemsize
    BCp, BOp = _rup(BC, 8), _rup(BO, 8)
    Vp, Tp = _rup(V, 128), _rup(tile_v, 128)
    return int(
        2 * _rup(V, 8) * Tp * lb             # (2L)^T blocks (resident or streamed)
        + 2 * BCp * Vp * 4                   # resident T_0
        + 2 * R * BOp * _rup(BC, 128) * 4    # block-diagonal weights
        + 2 * BOp * 128 * 4                  # bias
        + 2 * BOp * Tp * 4                   # output blocks
        + (R - 1) * BCp * Vp * lb            # Chebyshev basis scratch (MXU dtype)
    )


def _choose_plan(B, Cin, Cout, V, R, tile_v, mxu_dtype):
    """Pick (tile_v, laplacian/basis dtype, vmem_limit_bytes).

    Auto preference order:
      1) L resident in f32   (no HBM re-stream, exact)
      2) L resident in bf16  (no re-stream)
      3) L streamed in bf16, largest column tile that fits
    """
    cap = _vmem_capacity_bytes()
    budget = max(cap - (8 << 20), 16 << 20)
    f32 = jnp.dtype(jnp.float32)
    bf16 = jnp.dtype(jnp.bfloat16)
    dts = [jnp.dtype(mxu_dtype)] if mxu_dtype is not None else [f32, bf16]

    if tile_v is not None:
        tiles = [tile_v]
    elif V % 128 != 0:
        # Non-128-multiple V: blocks must equal the full dims (keep L resident).
        # TODO(synk): pad V to a multiple of 128 to allow streaming huge graphs.
        tiles = [V]
    else:
        tiles = [V] + [c for c in (1024, 512, 256, 128) if V % c == 0 and c < V]

    plans = []
    for tv in tiles:
        # Resident candidates try every allowed dtype (wide first); streamed
        # candidates default to the narrowest allowed dtype (bf16) because the
        # kernel is HBM-bandwidth bound on the (R-1)x Laplacian re-stream.
        for dt in (dts if tv == V else dts[-1:]):
            plans.append((tv, dt))

    tv, dt = plans[-1]
    for cand_tv, cand_dt in plans:
        if _vmem_estimate(B, Cin, Cout, V, R, cand_tv, cand_dt) <= budget:
            tv, dt = cand_tv, cand_dt
            break

    est = _vmem_estimate(B, Cin, Cout, V, R, tv, dt)
    lim = max(32 << 20, est + est // 4 + (4 << 20))
    lim = max(min(lim, cap - (1 << 20)), 16 << 20)
    return tv, dt, int(lim)


# ---------------------------------------------------------------------------
# Kernels
# ---------------------------------------------------------------------------
def _make_cheb_kernel(B, Cin, Cout, R, tile_v, basis_dtype):
    """R > 1: Chebyshev recursion + batch-fused channel contraction."""
    f32 = jnp.float32

    def kernel(x0t_ref, lap_ref, wbd_ref, bias_ref, out_ref, basis_ref):
        # x0t_ref  : (B*Cin, V)          resident T_0 (channel-major, f32)
        # lap_ref  : (V, tile_v)         contiguous column block of (2L)^T (MXU dtype)
        # wbd_ref  : (R, B*Cout, B*Cin)  resident block-diag transposed weights (f32)
        # bias_ref : (B*Cout, 1)         resident bias, tiled over batch (f32)
        # out_ref  : (B*Cout, tile_v)    lane-dense output tile
        # basis_ref: (R-1, B*Cin, V)     scratch: T_1 .. T_{R-1} in the MXU dtype
        ri = pl.program_id(0)            # Chebyshev sweep (builds T_{ri+1})
        j = pl.program_id(1)             # V column tile
        n_ri = pl.num_programs(0)
        col = pl.multiple_of(j * tile_v, tile_v)
        cols = pl.ds(col, tile_v)

        @pl.when(ri == 0)
        def _():
            # T_1 = L x0; the factor 2 folded into (2L)^T is undone exactly by 0.5.
            lap_blk = lap_ref[...]
            y1 = 0.5 * jnp.dot(x0t_ref[...].astype(lap_blk.dtype), lap_blk,
                               preferred_element_type=f32)
            basis_ref[0, :, cols] = y1.astype(basis_dtype)

        if R > 2:
            @pl.when(ri > 0)
            def _():
                lap_blk = lap_ref[...]
                # T_{ri+1}[:, cols] = T_ri @ (2L)^T[:, cols] - T_{ri-1}[:, cols]
                # (basis kept in the MXU dtype -> no per-step full-width recast).
                y_mm = jnp.dot(basis_ref[ri - 1], lap_blk,
                               preferred_element_type=f32)

                @pl.when(ri == 1)
                def _():
                    basis_ref[ri, :, cols] = (
                        y_mm - x0t_ref[:, cols]).astype(basis_dtype)

                @pl.when(ri > 1)
                def _():
                    basis_ref[ri, :, cols] = (
                        y_mm - basis_ref[ri - 2, :, cols].astype(f32)
                    ).astype(basis_dtype)

        @pl.when(ri == n_ri - 1)
        def _():
            # Fused channel contraction for the whole batch at once via
            # block-diagonal weights: out[:, cols] = sum_r Wbd_r @ T_r[:, cols] + b.
            acc = jnp.dot(wbd_ref[0], x0t_ref[:, cols],
                          preferred_element_type=f32)
            for r in range(1, R):                       # static unroll, R is small
                acc = acc + jnp.dot(wbd_ref[r],
                                    basis_ref[r - 1, :, cols].astype(f32),
                                    preferred_element_type=f32)
            out_ref[...] = acc + bias_ref[...]

    return kernel


def _make_cheb_r1_kernel(tile_v):
    """R == 1: pure per-vertex channel mixing; no Laplacian input at all."""
    f32 = jnp.float32

    def kernel(x0t_ref, wbd_ref, bias_ref, out_ref):
        j = pl.program_id(0)
        cols = pl.ds(pl.multiple_of(j * tile_v, tile_v), tile_v)
        out_ref[...] = jnp.dot(wbd_ref[0], x0t_ref[:, cols],
                               preferred_element_type=f32) + bias_ref[...]

    return kernel


# ---------------------------------------------------------------------------
# Wrapper
# ---------------------------------------------------------------------------
def _block_diag_weights(weight, B):
    """(R, Cin, Cout) -> (R, B*Cout, B*Cin): W_r^T repeated block-diagonally."""
    R, Cin, Cout = weight.shape
    wt = jnp.transpose(weight, (0, 2, 1)).astype(jnp.float32)        # (R, Cout, Cin)
    eye_b = jnp.eye(B, dtype=jnp.float32)
    w5 = eye_b[None, :, None, :, None] * wt[:, None, :, None, :]     # (R,B,Cout,B,Cin)
    return w5.reshape(R, B * Cout, B * Cin)


def _pick_r1_tile(V):
    if V % 128 != 0 or V <= 2048:
        return V
    for c in (2048, 1024, 512, 256, 128):
        if V % c == 0:
            return c
    return V


def cheb_conv_pallas(x, laplacian, weight, bias=None, *, tile_v=None, mxu_dtype=None):
    """Forward of ChebConv: x (B, Cin, V) -> (B, Cout, V)."""
    B, Cin, V = x.shape
    R, _, Cout = weight.shape
    BC, BO = B * Cin, B * Cout

    if laplacian is None and R > 1:
        raise ValueError("Can't perform Chebyshev convolution without laplacian if R > 1")

    # Channel-major T_0: x0t[b*Cin + c, v] = x[b, c, v]  (pure reshape, no transpose).
    x0t = x.reshape(BC, V).astype(jnp.float32)
    w_bd = _block_diag_weights(weight, B)                            # (R, BO, BC)
    b_arr = (jnp.zeros((Cout,), jnp.float32) if bias is None
             else bias.astype(jnp.float32))
    bias_bd = jnp.tile(b_arr, (B,)).reshape(BO, 1)

    cap = _vmem_capacity_bytes()

    if R == 1:
        tv = tile_v if tile_v is not None else _pick_r1_tile(V)
        assert V % tv == 0, (V, tv)
        nj = V // tv
        BCp, BOp = _rup(BC, 8), _rup(BO, 8)
        est1 = (2 * BCp * _rup(V, 128) + 2 * BOp * _rup(tv, 128)
                + 2 * BOp * 128 + 2 * BOp * _rup(BC, 128)) * 4
        lim1 = int(max(min(max(32 << 20, est1 + est1 // 4 + (2 << 20)),
                           cap - (1 << 20)), 16 << 20))
        out2 = pl.pallas_call(
            _make_cheb_r1_kernel(tv),
            out_shape=jax.ShapeDtypeStruct((BO, V), jnp.float32),
            grid_spec=pltpu.PrefetchScalarGridSpec(
                num_scalar_prefetch=0,
                grid=(nj,),
                in_specs=[
                    pl.BlockSpec((BC, V), lambda j: (0, 0)),          # resident T_0
                    pl.BlockSpec((1, BO, BC), lambda j: (0, 0, 0)),   # resident weights
                    pl.BlockSpec((BO, 1), lambda j: (0, 0)),          # resident bias
                ],
                out_specs=pl.BlockSpec((BO, tv), lambda j: (0, j)),
            ),
            compiler_params=pltpu.CompilerParams(
                dimension_semantics=("parallel",),
                vmem_limit_bytes=lim1,
            ),
        )(x0t, w_bd, bias_bd)
        return out2.reshape(B, Cout, V)

    tv, lap_dt, vmem_limit = _choose_plan(B, Cin, Cout, V, R, tile_v, mxu_dtype)
    assert V % tv == 0, (V, tv)
    nj = V // tv
    n_ri = R - 1

    # (2L)^T with the recursion's factor 2 folded in (undone exactly by the 0.5
    # on the T_1 term), cast to the streaming dtype, and pre-tiled into
    # contiguous (V, tv) column blocks so each streamed block is one long
    # contiguous DMA burst instead of V strided bursts of tv elements.
    lap2t = jnp.transpose(2.0 * laplacian.astype(jnp.float32)).astype(lap_dt)
    lap_blocks = lap2t.reshape(V, nj, tv).transpose(1, 0, 2)         # (nj, V, tv)

    kernel = _make_cheb_kernel(B, Cin, Cout, R, tv, lap_dt)

    if n_ri == 1:
        out_map = lambda ri, j: (0, j)
        j_sem = "parallel"            # T_1 tiles are independent -> megacore over V
    else:
        last = n_ri - 1
        # Park the output window on block 0 for all non-final sweeps so stale
        # VMEM is never flushed to HBM; only the final sweep writes back.
        out_map = lambda ri, j: (0, jnp.where(ri == last, j, 0))
        j_sem = "arbitrary"           # building T_{r+1} needs the *full* T_r

    out2 = pl.pallas_call(
        kernel,
        out_shape=jax.ShapeDtypeStruct((BO, V), jnp.float32),
        grid_spec=pltpu.PrefetchScalarGridSpec(
            num_scalar_prefetch=0,
            grid=(n_ri, nj),
            in_specs=[
                pl.BlockSpec((BC, V), lambda ri, j: (0, 0)),            # resident T_0
                pl.BlockSpec((None, V, tv), lambda ri, j: (j, 0, 0)),   # (2L)^T block
                pl.BlockSpec((R, BO, BC), lambda ri, j: (0, 0, 0)),     # resident weights
                pl.BlockSpec((BO, 1), lambda ri, j: (0, 0)),            # resident bias
            ],
            out_specs=pl.BlockSpec((BO, tv), out_map),
            scratch_shapes=[pltpu.VMEM((R - 1, BC, V), lap_dt)],
        ),
        compiler_params=pltpu.CompilerParams(
            dimension_semantics=("arbitrary", j_sem),
            vmem_limit_bytes=vmem_limit,
        ),
    )(x0t, lap_blocks, w_bd, bias_bd)
    return out2.reshape(B, Cout, V)


# ---------------------------------------------------------------------------
# Pure-JAX reference (direct port of the PyTorch cheb_conv) + test harness
# ---------------------------------------------------------------------------
def cheb_conv_reference(x, laplacian, weight, bias):
    B, Cin, V = x.shape
    R = weight.shape[0]
    x0 = jnp.transpose(x, (2, 0, 1)).reshape(V, B * Cin)
    xs = [x0]
    if R > 1:
        x1 = jnp.matmul(laplacian, x0, precision="highest")
        xs.append(x1)
        for _ in range(2, R):
            x2 = 2.0 * jnp.matmul(laplacian, x1, precision="highest") - x0
            xs.append(x2)
            x0, x1 = x1, x2
    xst = jnp.stack(xs, 0).reshape(R, V, B, Cin)
    out = jnp.tensordot(xst, weight, axes=([0, 3], [0, 1]),
                        precision="highest")                 # (V, B, Cout)
    if bias is not None:
        out = out + bias
    return jnp.transpose(out, (1, 2, 0))                     # (B, Cout, V)


def make_rescaled_laplacian(key, V):
    """Deterministic synthetic graph: rescaled symmetric-normalized laplacian."""
    a = jax.random.uniform(key, (V, V), dtype=jnp.float32)
    adj = ((a + a.T) * 0.5 > 0.9).astype(jnp.float32)
    adj = adj * (1.0 - jnp.eye(V, dtype=jnp.float32))
    deg = jnp.maximum(adj.sum(-1), 1.0)
    d_inv_sqrt = 1.0 / jnp.sqrt(deg)
    l_sym = jnp.eye(V, dtype=jnp.float32) - d_inv_sqrt[:, None] * adj * d_inv_sqrt[None, :]
    return l_sym - jnp.eye(V, dtype=jnp.float32)


if __name__ == "__main__":
    B, Cin, Cout, V, R = 2, 4, 8, 256, 3

    key = jax.random.PRNGKey(0)
    k_x, k_w, k_l = jax.random.split(key, 3)

    x = jax.random.normal(k_x, (B, Cin, V), dtype=jnp.float32)
    # nn.Parameter init: weight ~ kaiming_normal (fan_in = Cin*Cout), bias = 0.01
    std = math.sqrt(2.0 / (Cin * Cout))
    weight = std * jax.random.normal(k_w, (R, Cin, Cout), dtype=jnp.float32)
    bias = jnp.full((Cout,), 0.01, dtype=jnp.float32)
    laplacian = make_rescaled_laplacian(k_l, V)

    ref = cheb_conv_reference(x, laplacian, weight, bias)

    # 1) Auto plan: L resident in f32 at this size.
    out = jax.block_until_ready(cheb_conv_pallas(x, laplacian, weight, bias))
    assert out.shape == (B, Cout, V), out.shape
    err = float(jnp.max(jnp.abs(out - ref)))
    assert jnp.allclose(out, ref, atol=1e-3, rtol=1e-3), ("auto", err)

    # 2) Forced multi-tile streaming path, f32 Laplacian.
    out_s = jax.block_until_ready(
        cheb_conv_pallas(x, laplacian, weight, bias, tile_v=128, mxu_dtype=jnp.float32))
    err_s = float(jnp.max(jnp.abs(out_s - ref)))
    assert jnp.allclose(out_s, ref, atol=1e-3, rtol=1e-3), ("stream_f32", err_s)

    # 3) Forced streaming with the bf16 default (the large-graph configuration).
    out_b = jax.block_until_ready(
        cheb_conv_pallas(x, laplacian, weight, bias, tile_v=128))
    err_b = float(jnp.max(jnp.abs(out_b - ref)))
    assert jnp.allclose(out_b, ref, atol=5e-2, rtol=5e-2), ("stream_bf16", err_b)

    # 4) R == 2 (single sweep, megacore-parallel V tiles).
    w2 = weight[:2]
    ref2 = cheb_conv_reference(x, laplacian, w2, bias)
    out_r2 = jax.block_until_ready(
        cheb_conv_pallas(x, laplacian, w2, bias, tile_v=128, mxu_dtype=jnp.float32))
    err2 = float(jnp.max(jnp.abs(out_r2 - ref2)))
    assert jnp.allclose(out_r2, ref2, atol=1e-3, rtol=1e-3), ("R2", err2)

    # 5) R == 1 without a Laplacian (dedicated kernel, no dummy L streamed).
    w1 = weight[:1]
    ref1 = cheb_conv_reference(x, None, w1, bias)
    out_r1 = jax.block_until_ready(cheb_conv_pallas(x, None, w1, bias))
    err1 = float(jnp.max(jnp.abs(out_r1 - ref1)))
    assert jnp.allclose(out_r1, ref1, atol=1e-3, rtol=1e-3), ("R1", err1)

    print("KERNEL_OK")
</pallas_src>

<mosaic_0001>
module attributes {stable_mosaic.version = 11 : i64} {
  func.func @kernel(%arg0: i32, %arg1: i32, %arg2: memref<8x256xf32, #tpu.memory_space<vmem>>, %arg3: memref<1x256x256xf32, #tpu.memory_space<vmem>>, %arg4: memref<3x16x8xf32, #tpu.memory_space<vmem>>, %arg5: memref<16x1xf32, #tpu.memory_space<vmem>>, %arg6: memref<16x256xf32, #tpu.memory_space<vmem>>, %arg7: memref<2x8x256xf32, #tpu.memory_space<vmem>>) attributes {dimension_semantics = [#tpu.dimension_semantics<arbitrary>, #tpu.dimension_semantics<arbitrary>], iteration_bounds = array<i64: 2, 1>, scalar_prefetch = 0 : i64, scratch_operands = 1 : i64, tpu.core_type = #tpu.core_type<tc>, window_params = [{pipeline_mode = #tpu.pipeline_mode<synchronous>, transform_indices = @transform_0, window_bounds = array<i64: 8, 256>}, {transform_indices = @transform_1, window_bounds = array<i64: 1, 256, 256>}, {pipeline_mode = #tpu.pipeline_mode<synchronous>, transform_indices = @transform_2, window_bounds = array<i64: 3, 16, 8>}, {pipeline_mode = #tpu.pipeline_mode<synchronous>, transform_indices = @transform_3, window_bounds = array<i64: 16, 1>}, {transform_indices = @transform_4, window_bounds = array<i64: 16, 256>}]} {
    %c256_i32 = arith.constant 256 : i32
    %0 = arith.muli %arg1, %c256_i32 : i32
    %1 = tpu.assume_multiple %0, 256 : i32
    %c0_i32 = arith.constant 0 : i32
    %2 = arith.cmpi eq, %arg0, %c0_i32 : i32
    %3 = arith.extui %2 : i1 to i32
    %c0_i32_0 = arith.constant 0 : i32
    %4 = arith.cmpi ne, %3, %c0_i32_0 : i32
    scf.if %4 {
      %c0 = arith.constant 0 : index
      %c0_4 = arith.constant 0 : index
      %c0_5 = arith.constant 0 : index
      %11 = vector.load %arg3[%c0, %c0_4, %c0_5] : memref<1x256x256xf32, #tpu.memory_space<vmem>>, vector<1x256x256xf32>
      %12 = vector.shape_cast %11 : vector<1x256x256xf32> to vector<256x256xf32>
      %c0_6 = arith.constant 0 : index
      %c0_7 = arith.constant 0 : index
      %13 = vector.load %arg2[%c0_6, %c0_7] : memref<8x256xf32, #tpu.memory_space<vmem>>, vector<8x256xf32>
      %cst = arith.constant dense<0.000000e+00> : vector<8x256xf32>
      %14 = tpu.matmul %13, %12, %cst {dimension_numbers = #tpu.dot_dimension_numbers<[1], [0], [0], [1], [0, 0, 1, 1], [], []>} : vector<8x256xf32>, vector<256x256xf32>, vector<8x256xf32> -> vector<8x256xf32>
      %cst_8 = arith.constant 5.000000e-01 : f32
      %15 = vector.broadcast %cst_8 : f32 to vector<8x256xf32>
      %16 = arith.mulf %15, %14 : vector<8x256xf32>
      %c0_9 = arith.constant 0 : index
      %c0_10 = arith.constant 0 : index
      %17 = arith.index_cast %1 : i32 to index
      %18 = vector.load %arg7[%c0_9, %c0_10, %17] : memref<2x8x256xf32, #tpu.memory_space<vmem>>, vector<1x8x256xf32>
      %19 = vector.shape_cast %18 : vector<1x8x256xf32> to vector<8x256xf32>
      %20 = vector.shape_cast %16 : vector<8x256xf32> to vector<1x8x256xf32>
      tpu.vector_store %arg7[%c0_9, %c0_10, %17], %20 {strides = array<i32>} : memref<2x8x256xf32, #tpu.memory_space<vmem>>, vector<1x8x256xf32>,
    } else {
    }
    %c0_i32_1 = arith.constant 0 : i32
    %5 = arith.cmpi sgt, %arg0, %c0_i32_1 : i32
    %6 = arith.extui %5 : i1 to i32
    %c0_i32_2 = arith.constant 0 : i32
    %7 = arith.cmpi ne, %6, %c0_i32_2 : i32
    scf.if %7 {
      %c0 = arith.constant 0 : index
      %c0_4 = arith.constant 0 : index
      %c0_5 = arith.constant 0 : index
      %11 = vector.load %arg3[%c0, %c0_4, %c0_5] : memref<1x256x256xf32, #tpu.memory_space<vmem>>, vector<1x256x256xf32>
      %12 = vector.shape_cast %11 : vector<1x256x256xf32> to vector<256x256xf32>
      %c1_i32_6 = arith.constant 1 : i32
      %13 = arith.subi %arg0, %c1_i32_6 : i32
      %14 = arith.index_cast %13 : i32 to index
      %c0_7 = arith.constant 0 : index
      %c0_8 = arith.constant 0 : index
      %15 = vector.load %arg7[%14, %c0_7, %c0_8] : memref<2x8x256xf32, #tpu.memory_space<vmem>>, vector<1x8x256xf32>
      %16 = vector.shape_cast %15 : vector<1x8x256xf32> to vector<8x256xf32>
      %cst = arith.constant dense<0.000000e+00> : vector<8x256xf32>
      %17 = tpu.matmul %16, %12, %cst {dimension_numbers = #tpu.dot_dimension_numbers<[1], [0], [0], [1], [0, 0, 1, 1], [], []>} : vector<8x256xf32>, vector<256x256xf32>, vector<8x256xf32> -> vector<8x256xf32>
      %c1_i32_9 = arith.constant 1 : i32
      %18 = arith.cmpi eq, %arg0, %c1_i32_9 : i32
      %19 = arith.extui %18 : i1 to i32
      %c0_i32_10 = arith.constant 0 : i32
      %20 = arith.cmpi ne, %19, %c0_i32_10 : i32
      scf.if %20 {
        %c0_13 = arith.constant 0 : index
        %24 = arith.index_cast %1 : i32 to index
        %25 = vector.load %arg2[%c0_13, %24] : memref<8x256xf32, #tpu.memory_space<vmem>>, vector<8x256xf32>
        %26 = arith.subf %17, %25 : vector<8x256xf32>
        %27 = arith.index_cast %arg0 : i32 to index
        %c0_14 = arith.constant 0 : index
        %28 = arith.index_cast %1 : i32 to index
        %29 = vector.load %arg7[%27, %c0_14, %28] : memref<2x8x256xf32, #tpu.memory_space<vmem>>, vector<1x8x256xf32>
        %30 = vector.shape_cast %29 : vector<1x8x256xf32> to vector<8x256xf32>
        %31 = vector.shape_cast %26 : vector<8x256xf32> to vector<1x8x256xf32>
        tpu.vector_store %arg7[%27, %c0_14, %28], %31 {strides = array<i32>} : memref<2x8x256xf32, #tpu.memory_space<vmem>>, vector<1x8x256xf32>,
      } else {
      }
      %c1_i32_11 = arith.constant 1 : i32
      %21 = arith.cmpi sgt, %arg0, %c1_i32_11 : i32
      %22 = arith.extui %21 : i1 to i32
      %c0_i32_12 = arith.constant 0 : i32
      %23 = arith.cmpi ne, %22, %c0_i32_12 : i32
      scf.if %23 {
        %c2_i32 = arith.constant 2 : i32
        %24 = arith.subi %arg0, %c2_i32 : i32
        %25 = arith.index_cast %24 : i32 to index
        %c0_13 = arith.constant 0 : index
        %26 = arith.index_cast %1 : i32 to index
        %27 = vector.load %arg7[%25, %c0_13, %26] : memref<2x8x256xf32, #tpu.memory_space<vmem>>, vector<1x8x256xf32>
        %28 = vector.shape_cast %27 : vector<1x8x256xf32> to vector<8x256xf32>
        %29 = arith.subf %17, %28 : vector<8x256xf32>
        %30 = arith.index_cast %arg0 : i32 to index
        %c0_14 = arith.constant 0 : index
        %31 = arith.index_cast %1 : i32 to index
        %32 = vector.load %arg7[%30, %c0_14, %31] : memref<2x8x256xf32, #tpu.memory_space<vmem>>, vector<1x8x256xf32>
        %33 = vector.shape_cast %32 : vector<1x8x256xf32> to vector<8x256xf32>
        %34 = vector.shape_cast %29 : vector<8x256xf32> to vector<1x8x256xf32>
        tpu.vector_store %arg7[%30, %c0_14, %31], %34 {strides = array<i32>} : memref<2x8x256xf32, #tpu.memory_space<vmem>>, vector<1x8x256xf32>,
      } else {
      }
    } else {
    }
    %c1_i32 = arith.constant 1 : i32
    %8 = arith.cmpi eq, %arg0, %c1_i32 : i32
    %9 = arith.extui %8 : i1 to i32
    %c0_i32_3 = arith.constant 0 : i32
    %10 = arith.cmpi ne, %9, %c0_i32_3 : i32
    scf.if %10 {
      %c0 = arith.constant 0 : index
      %c0_4 = arith.constant 0 : index
      %c0_5 = arith.constant 0 : index
      %11 = vector.load %arg4[%c0, %c0_4, %c0_5] : memref<3x16x8xf32, #tpu.memory_space<vmem>>, vector<1x16x8xf32>
      %12 = vector.shape_cast %11 : vector<1x16x8xf32> to vector<16x8xf32>
      %c0_6 = arith.constant 0 : index
      %13 = arith.index_cast %1 : i32 to index
      %14 = vector.load %arg2[%c0_6, %13] : memref<8x256xf32, #tpu.memory_space<vmem>>, vector<8x256xf32>
      %cst = arith.constant dense<0.000000e+00> : vector<16x256xf32>
      %15 = tpu.matmul %12, %14, %cst {dimension_numbers = #tpu.dot_dimension_numbers<[1], [0], [0], [1], [0, 0, 1, 1], [], []>} : vector<16x8xf32>, vector<8x256xf32>, vector<16x256xf32> -> vector<16x256xf32>
      %c1 = arith.constant 1 : index
      %c0_7 = arith.constant 0 : index
      %c0_8 = arith.constant 0 : index
      %16 = vector.load %arg4[%c1, %c0_7, %c0_8] : memref<3x16x8xf32, #tpu.memory_space<vmem>>, vector<1x16x8xf32>
      %17 = vector.shape_cast %16 : vector<1x16x8xf32> to vector<16x8xf32>
      %c0_9 = arith.constant 0 : index
      %c0_10 = arith.constant 0 : index
      %18 = arith.index_cast %1 : i32 to index
      %19 = vector.load %arg7[%c0_9, %c0_10, %18] : memref<2x8x256xf32, #tpu.memory_space<vmem>>, vector<1x8x256xf32>
      %20 = vector.shape_cast %19 : vector<1x8x256xf32> to vector<8x256xf32>
      %cst_11 = arith.constant dense<0.000000e+00> : vector<16x256xf32>
      %21 = tpu.matmul %17, %20, %cst_11 {dimension_numbers = #tpu.dot_dimension_numbers<[1], [0], [0], [1], [0, 0, 1, 1], [], []>} : vector<16x8xf32>, vector<8x256xf32>, vector<16x256xf32> -> vector<16x256xf32>
      %22 = arith.addf %15, %21 : vector<16x256xf32>
      %c2 = arith.constant 2 : index
      %c0_12 = arith.constant 0 : index
      %c0_13 = arith.constant 0 : index
      %23 = vector.load %arg4[%c2, %c0_12, %c0_13] : memref<3x16x8xf32, #tpu.memory_space<vmem>>, vector<1x16x8xf32>
      %24 = vector.shape_cast %23 : vector<1x16x8xf32> to vector<16x8xf32>
      %c1_14 = arith.constant 1 : index
      %c0_15 = arith.constant 0 : index
      %25 = arith.index_cast %1 : i32 to index
      %26 = vector.load %arg7[%c1_14, %c0_15, %25] : memref<2x8x256xf32, #tpu.memory_space<vmem>>, vector<1x8x256xf32>
      %27 = vector.shape_cast %26 : vector<1x8x256xf32> to vector<8x256xf32>
      %cst_16 = arith.constant dense<0.000000e+00> : vector<16x256xf32>
      %28 = tpu.matmul %24, %27, %cst_16 {dimension_numbers = #tpu.dot_dimension_numbers<[1], [0], [0], [1], [0, 0, 1, 1], [], []>} : vector<16x8xf32>, vector<8x256xf32>, vector<16x256xf32> -> vector<16x256xf32>
      %29 = arith.addf %22, %28 : vector<16x256xf32>
      %c0_17 = arith.constant 0 : index
      %c0_18 = arith.constant 0 : index
      %30 = vector.load %arg5[%c0_17, %c0_18] : memref<16x1xf32, #tpu.memory_space<vmem>>, vector<16x1xf32>
      %31 = vector.broadcast %30 : vector<16x1xf32> to vector<16x256xf32>
      %32 = arith.addf %29, %31 : vector<16x256xf32>
      %c0_19 = arith.constant 0 : index
      %c0_20 = arith.constant 0 : index
      %33 = vector.load %arg6[%c0_19, %c0_20] : memref<16x256xf32, #tpu.memory_space<vmem>>, vector<16x256xf32>
      tpu.vector_store %arg6[%c0_19, %c0_20], %32 {strides = array<i32>} : memref<16x256xf32, #tpu.memory_space<vmem>>, vector<16x256xf32>,
    } else {
    }
    return
  }
  func.func @transform_0(%arg0: i32, %arg1: i32) -> (i32, i32) {
    %c0_i32 = arith.constant 0 : i32
    %c0_i32_0 = arith.constant 0 : i32
    %c0_i32_1 = arith.constant 0 : i32
    return %c0_i32, %c0_i32_0 : i32, i32
  }
  func.func @transform_1(%arg0: i32, %arg1: i32) -> (i32, i32, i32) {
    %c0_i32 = arith.constant 0 : i32
    %c0_i32_0 = arith.constant 0 : i32
    %c0_i32_1 = arith.constant 0 : i32
    return %arg1, %c0_i32, %c0_i32_0 : i32, i32, i32
  }
  func.func @transform_2(%arg0: i32, %arg1: i32) -> (i32, i32, i32) {
    %c0_i32 = arith.constant 0 : i32
    %c0_i32_0 = arith.constant 0 : i32
    %c0_i32_1 = arith.constant 0 : i32
    %c0_i32_2 = arith.constant 0 : i32
    return %c0_i32, %c0_i32_0, %c0_i32_1 : i32, i32, i32
  }
  func.func @transform_3(%arg0: i32, %arg1: i32) -> (i32, i32) {
    %c0_i32 = arith.constant 0 : i32
    %c0_i32_0 = arith.constant 0 : i32
    %c0_i32_1 = arith.constant 0 : i32
    return %c0_i32, %c0_i32_0 : i32, i32
  }
  func.func @transform_4(%arg0: i32, %arg1: i32) -> (i32, i32) {
    %c1_i32 = arith.constant 1 : i32
    %0 = arith.cmpi eq, %arg0, %c1_i32 : i32
    %c0_i32 = arith.constant 0 : i32
    %1 = arith.select %0, %arg1, %c0_i32 : i32
    %c0_i32_0 = arith.constant 0 : i32
    %c0_i32_1 = arith.constant 0 : i32
    return %c0_i32_0, %1 : i32, i32
  }
}

</mosaic_0001>

<llo_original>
// kernel: tpu_custom_call.1
$region0: #{tpu_custom_call.1}
  #allocation0 [shape = 'u32[]', space=smem, size = 0x4, offset = 0x4, fixed_abs, tag = 'smem constant byte address 0x4 - core index']
  #allocation1 [shape = 'u32[144,128]{1,0:T(1,128)}', space=vmem, size = 0x12000, scoped, tag = 'internal scratch']
  #allocation2 [shape = 'f32[2,8,256]{2,1,0:T(8,128)}', space=vmem, size = 0x4000, scoped, tag = 'scratch operand']
  %s0 = inlined_call_operand.vmem [shape: f32[8,256], index: 0, kind: input, shape index: {}]
  %s1 = inlined_call_operand.hbm [shape: f32[1,256,256], index: 1, kind: input, shape index: {}]
  %s2 = inlined_call_operand.vmem [shape: f32[3,16,8], index: 2, kind: input, shape index: {}]
  %s3 = inlined_call_operand.vmem [shape: f32[16,1], index: 3, kind: input, shape index: {}]
  %s4 = inlined_call_operand.hbm [shape: f32[16,256], index: 4, kind: output, shape index: {}]
  %s5 = sld [smem:[#allocation0]]
  $region73: #{tpu_custom_call.1} parent=0
    _
  %s7 = ssub.s32 1, %s5
  %s8 = scalar_select 0, %s7, %s5
  $region1: #{tpu_custom_call.1} parent=0
    #allocation3 [shape = 'u8[262144]{0}', space=vmem, size = 0x40000, scoped, tag = 'input window, operand 1, single buffered']
    #allocation4 [shape = 's32[2]{0}', space=sflag, size = 0x8, scoped, tag = 'scoped memory for tpu_custom_call.1']
    #allocation5 [shape = 's32[2]{0}', space=sflag, size = 0x8, scoped, tag = 'scoped memory for tpu_custom_call.1']
    #allocation6 [shape = 'u8[32768]{0}', space=vmem, size = 0x8000, scoped, tag = 'output window, operand 0']
    %9 = vsyncpa [#allocation4], 0
    %10 = vsyncpa [#allocation5], 0
    %s11 = scalar_lea.sflag [#allocation5], 1
    %12 = vsyncpa %s11, 0
    loop: start=0, step=1, limit=4
    $region2: #{tpu_custom_call.1} parent=1 // loop_pre_header
      _
    $region3: #{tpu_custom_call.1} parent=1 // loop_header
      %s14 = sphi 0, %s18
      %p15 = scmp.ge.s32.totalorder %s14, 4
      %s21 = sphi 0, %s33
      %s22 = sphi 0, %s29
      %s23 = sphi 0, %s21
      %s24 = sphi 0, %s22
      %s25 = sphi 0, %s23
      %s26 = sphi 0, %s24
      %s34 = sphi 0, %s34
      %s36 = sphi 0, %s34
      %s37 = sphi 0, %s36
      %s51 = sphi 0, %s37
      %s57 = sphi 0, %s59
      %s60 = sphi 0, %s57
      %s61 = sphi 0, %s60
      %s77 = sphi 0, %s61
      %s81 = sphi 0, %s81
      %s83 = sphi 0, %s81
      %s84 = sphi 0, %s83
      %s98 = sphi 0, %s84
      %s102 = sphi 0, %s102
      %s104 = sphi 0, %s102
      %s105 = sphi 0, %s104
      %s119 = sphi 0, %s105
      %s129 = sphi 0, %s131
      %s132 = sphi 0, %s129
      %s133 = sphi 0, %s132
      %s149 = sphi 0, %s133
    $region4: #{tpu_custom_call.1} parent=1 // loop_header_branch
      %17 = sbr.rel (%p15) target = $region8
    $region5: #{tpu_custom_call.1} parent=1 // loop_body
      %s19 = ssub.s32 %s14, 1
      %s20 = ssub.s32 %s14, 2
      %s27 = sadd.s32 1, %s22
      %p28 = scmp.ge.s32.totalorder %s27, 1
      %s29 = scalar_select %p28, 0, %s27
      %s30 = sadd.s32 1, %s21
      %s31 = scalar_select %p28, %s30, %s21
      %p32 = scmp.ge.s32.totalorder %s31, 2
      %s33 = scalar_select %p32, 0, %s31
      %s35 = sadd.s32 %s34, 1
      %p38 = scmp.eq.s32.totalorder %s14, 1
      %p39 = scmp.ne.s32.totalorder %s34, %s36
      %p40 = scmp.eq.s32.totalorder %s14, 0
      %p41 = por %p39, %p40
      %p42 = scmp.ne.s32.totalorder %s34, %s36
      %p43 = scmp.eq.s32.totalorder %s19, 1
      %p44 = por %p42, %p43
      %p45 = scmp.ne.s32.totalorder %s36, %s37
      %p46 = scmp.eq.s32.totalorder %s19, 0
      %p47 = por %p45, %p46
      %p48 = scmp.ne.s32.totalorder %s36, %s37
      %p49 = scmp.eq.s32.totalorder %s20, 1
      %p50 = por %p48, %p49
      %p52 = scmp.ne.s32.totalorder %s37, %s51
      %p53 = scmp.eq.s32.totalorder %s20, 0
      %p54 = por %p52, %p53
      %s55 = ssub.s32 %s22, %s29
      %p56 = scmp.eq.s32.totalorder %s55, 0
      %s58 = sadd.s32 %s57, 1
      %s59 = scalar_select %p56, %s57, %s58
      %p62 = pneg %p56
      %p63 = scmp.eq.s32.totalorder %s14, 1
      %p64 = por %p62, %p63
      %p65 = scmp.ne.s32.totalorder %s57, %s60
      %p66 = scmp.eq.s32.totalorder %s14, 0
      %p67 = por %p65, %p66
      %p68 = scmp.ne.s32.totalorder %s57, %s60
      %p69 = scmp.eq.s32.totalorder %s19, 1
      %p70 = por %p68, %p69
      %p71 = scmp.ne.s32.totalorder %s60, %s61
      %p72 = scmp.eq.s32.totalorder %s19, 0
      %p73 = por %p71, %p72
      %p74 = scmp.ne.s32.totalorder %s60, %s61
      %p75 = scmp.eq.s32.totalorder %s20, 1
      %p76 = por %p74, %p75
      %p78 = scmp.ne.s32.totalorder %s61, %s77
      %p79 = scmp.eq.s32.totalorder %s20, 0
      %p80 = por %p78, %p79
      %s82 = sadd.s32 %s81, 1
      %p85 = scmp.eq.s32.totalorder %s14, 1
      %p86 = scmp.ne.s32.totalorder %s81, %s83
      %p87 = scmp.eq.s32.totalorder %s14, 0
      %p88 = por %p86, %p87
      %p89 = scmp.ne.s32.totalorder %s81, %s83
      %p90 = scmp.eq.s32.totalorder %s19, 1
      %p91 = por %p89, %p90
      %p92 = scmp.ne.s32.totalorder %s83, %s84
      %p93 = scmp.eq.s32.totalorder %s19, 0
      %p94 = por %p92, %p93
      %p95 = scmp.ne.s32.totalorder %s83, %s84
      %p96 = scmp.eq.s32.totalorder %s20, 1
      %p97 = por %p95, %p96
      %p99 = scmp.ne.s32.totalorder %s84, %s98
      %p100 = scmp.eq.s32.totalorder %s20, 0
      %p101 = por %p99, %p100
      %s103 = sadd.s32 %s102, 1
      %p106 = scmp.eq.s32.totalorder %s14, 1
      %p107 = scmp.ne.s32.totalorder %s102, %s104
      %p108 = scmp.eq.s32.totalorder %s14, 0
      %p109 = por %p107, %p108
      %p110 = scmp.ne.s32.totalorder %s102, %s104
      %p111 = scmp.eq.s32.totalorder %s19, 1
      %p112 = por %p110, %p111
      %p113 = scmp.ne.s32.totalorder %s104, %s105
      %p114 = scmp.eq.s32.totalorder %s19, 0
      %p115 = por %p113, %p114
      %p116 = scmp.ne.s32.totalorder %s104, %s105
      %p117 = scmp.eq.s32.totalorder %s20, 1
      %p118 = por %p116, %p117
      %p120 = scmp.ne.s32.totalorder %s105, %s119
      %p121 = scmp.eq.s32.totalorder %s20, 0
      %p122 = por %p120, %p121
      %p123 = scmp.eq.s32.totalorder %s21, 1
      %s124 = scalar_select %p123, %s22, 0
      %p125 = scmp.eq.s32.totalorder %s33, 1
      %s126 = scalar_select %p125, %s29, 0
      %s127 = ssub.s32 %s124, %s126
      %p128 = scmp.eq.s32.totalorder %s127, 0
      %s130 = sadd.s32 %s129, 1
      %s131 = scalar_select %p128, %s129, %s130
      %p134 = pneg %p128
      %p135 = scmp.eq.s32.totalorder %s14, 1
      %p136 = por %p134, %p135
      %p137 = scmp.ne.s32.totalorder %s129, %s132
      %p138 = scmp.eq.s32.totalorder %s14, 0
      %p139 = por %p137, %p138
      %p140 = scmp.ne.s32.totalorder %s129, %s132
      %p141 = scmp.eq.s32.totalorder %s19, 1
      %p142 = por %p140, %p141
      %p143 = scmp.ne.s32.totalorder %s132, %s133
      %p144 = scmp.eq.s32.totalorder %s19, 0
      %p145 = por %p143, %p144
      %p146 = scmp.ne.s32.totalorder %s132, %s133
      %p147 = scmp.eq.s32.totalorder %s20, 1
      %p148 = por %p146, %p147
      %p150 = scmp.ne.s32.totalorder %s133, %s149
      %p151 = scmp.eq.s32.totalorder %s20, 0
      %p152 = por %p150, %p151
      %p153 = scmp.le.s32.totalorder 1, %s14
      %p154 = scmp.lt.s32.totalorder %s14, 3
      %p155 = pnand %p153, %p154
      %p156 = pneg %p155
      // Predicated region
      $region9: #{tpu_custom_call.1} parent=5 // pred_check
        _
      $region10: #{tpu_custom_call.1} parent=5 // pred_check_branch
        %158 = sbr.rel (%p155) target = $region12
      $region11: #{tpu_custom_call.1} parent=5 // pred_region
        %s159 = ssub.s32 %s14, 1
        // Predicated region
        $region13: #{tpu_custom_call.1} parent=11 // pred_check
          %p160 = pneg %p47
        $region14: #{tpu_custom_call.1} parent=11 // pred_check_branch
          %162 = sbr.rel (%p160) target = $region16
        $region15: #{tpu_custom_call.1} parent=11 // pred_region
          _
        $region16: #{tpu_custom_call.1} parent=11 // pred_fallthru
          _
        // Predicated region
        $region17: #{tpu_custom_call.1} parent=11 // pred_check
          %p163 = pneg %p73
        $region18: #{tpu_custom_call.1} parent=11 // pred_check_branch
          %165 = sbr.rel (%p163) target = $region20
        $region19: #{tpu_custom_call.1} parent=11 // pred_region
          %s167 = ssub.s32 8192, 8192
          %168 = vsyncadd [#allocation4], %s167
          %s169 = smul.addr %s24, 64
          %s170 = smul.addr %s169, 128
          %s171 = scalar_lea.hbm %s1, %s170
          %s172 = sshll.u32 [#allocation3], 4
          %s173 = int_to_ptr.vmem [resolvable:$true] %s172
          %178 = dma.hbm_to_vmem [thread:$0]  %s171, 8192, %s173, [#allocation4], 256, 256, 16
        $region20: #{tpu_custom_call.1} parent=11 // pred_fallthru
          _
        // Predicated region
        $region21: #{tpu_custom_call.1} parent=11 // pred_check
          %p179 = pneg %p94
        $region22: #{tpu_custom_call.1} parent=11 // pred_check_branch
          %181 = sbr.rel (%p179) target = $region24
        $region23: #{tpu_custom_call.1} parent=11 // pred_region
          _
        $region24: #{tpu_custom_call.1} parent=11 // pred_fallthru
          _
        // Predicated region
        $region25: #{tpu_custom_call.1} parent=11 // pred_check
          %p182 = pneg %p115
        $region26: #{tpu_custom_call.1} parent=11 // pred_check_branch
          %184 = sbr.rel (%p182) target = $region28
        $region27: #{tpu_custom_call.1} parent=11 // pred_region
          _
        $region28: #{tpu_custom_call.1} parent=11 // pred_fallthru
          _
      $region12: #{tpu_custom_call.1} parent=5 // pred_fallthru
        _
      %p185 = scmp.lt.s32.totalorder %s14, 2
      // Predicated region
      $region29: #{tpu_custom_call.1} parent=5 // pred_check
        %p186 = pneg %p185
      $region30: #{tpu_custom_call.1} parent=5 // pred_check_branch
        %188 = sbr.rel (%p186) target = $region32
      $region31: #{tpu_custom_call.1} parent=5 // pred_region
        _
      $region32: #{tpu_custom_call.1} parent=5 // pred_fallthru
        _
      %p189 = scmp.le.s32.totalorder 1, %s14
      %p190 = scmp.lt.s32.totalorder %s14, 3
      %p191 = pnand %p189, %p190
      %p192 = pneg %p191
      // Predicated region
      $region33: #{tpu_custom_call.1} parent=5 // pred_check
        _
      $region34: #{tpu_custom_call.1} parent=5 // pred_check_branch
        %194 = sbr.rel (%p191) target = $region36
      $region35: #{tpu_custom_call.1} parent=5 // pred_region
        %s195 = ssub.s32 %s14, 1
        // Predicated region
        $region37: #{tpu_custom_call.1} parent=35 // pred_check
          %p196 = pneg %p73
        $region38: #{tpu_custom_call.1} parent=35 // pred_check_branch
          %198 = sbr.rel (%p196) target = $region40
        $region39: #{tpu_custom_call.1} parent=35 // pred_region
          %199 = dma.done [#allocation4], 8192
        $region40: #{tpu_custom_call.1} parent=35 // pred_fallthru
          _
        %p200 = pneg %p47
        %p201 = pneg %p44
        %p202 = pneg %p73
        %p203 = pneg %p70
        %p204 = pneg %p94
        %p205 = pneg %p91
        %p206 = pneg %p115
        %p207 = pneg %p112
        %p208 = pneg %p145
        %p209 = pneg %p142
        %s210 = sand.u32 %s132, 1
        %s211 = scalar_lea.sflag [#allocation5], %s210
        %s212 = sand.u32 %s132, 1
        %s213 = smul.addr %s212, 32
        %s214 = scalar_lea.vmem [#allocation6], %s213
        %p215 = scmp.eq.s32.totalorder %s23, 1
        %s216 = scalar_select %p215, %s24, 0
        %s217 = smul.u32 2, %s216
        %s218 = smul.u32 %s24, 256
        %p219 = scmp.eq.s32.totalorder %s23, 0
        // Predicated region
        $region41: #{tpu_custom_call.1} parent=35 // pred_check
          %p220 = pneg %p219
        $region42: #{tpu_custom_call.1} parent=35 // pred_check_branch
          %222 = sbr.rel (%p220) target = $region44
        $region43: #{tpu_custom_call.1} parent=35 // pred_region
          %v223 = vld [vmem:[#allocation3] sm:$0xff]
          %v224 = vld [vmem:[#allocation3 + $0x8] sm:$0xff]
          %v225 = vld [vmem:[#allocation3 + $0x10] sm:$0xff]
          %v226 = vld [vmem:[#allocation3 + $0x18] sm:$0xff]
          %v227 = vld [vmem:[#allocation3 + $0x20] sm:$0xff]
          %v228 = vld [vmem:[#allocation3 + $0x28] sm:$0xff]
          %v229 = vld [vmem:[#allocation3 + $0x30] sm:$0xff]
          %v230 = vld [vmem:[#allocation3 + $0x38] sm:$0xff]
          %v231 = vld [vmem:[#allocation3 + $0x40] sm:$0xff]
          %v232 = vld [vmem:[#allocation3 + $0x48] sm:$0xff]
          %v233 = vld [vmem:[#allocation3 + $0x50] sm:$0xff]
          %v234 = vld [vmem:[#allocation3 + $0x58] sm:$0xff]
          %v235 = vld [vmem:[#allocation3 + $0x60] sm:$0xff]
          %v236 = vld [vmem:[#allocation3 + $0x68] sm:$0xff]
          %v237 = vld [vmem:[#allocation3 + $0x70] sm:$0xff]
          %v238 = vld [vmem:[#allocation3 + $0x78] sm:$0xff]
          %v239 = vld [vmem:[#allocation3 + $0x80] sm:$0xff]
          %v240 = vld [vmem:[#allocation3 + $0x88] sm:$0xff]
          %v241 = vld [vmem:[#allocation3 + $0x90] sm:$0xff]
          %v242 = vld [vmem:[#allocation3 + $0x98] sm:$0xff]
          %v243 = vld [vmem:[#allocation3 + $0xa0] sm:$0xff]
          %v244 = vld [vmem:[#allocation3 + $0xa8] sm:$0xff]
          %v245 = vld [vmem:[#allocation3 + $0xb0] sm:$0xff]
          %v246 = vld [vmem:[#allocation3 + $0xb8] sm:$0xff]
          %v247 = vld [vmem:[#allocation3 + $0xc0] sm:$0xff]
          %v248 = vld [vmem:[#allocation3 + $0xc8] sm:$0xff]
          %v249 = vld [vmem:[#allocation3 + $0xd0] sm:$0xff]
          %v250 = vld [vmem:[#allocation3 + $0xd8] sm:$0xff]
          %v251 = vld [vmem:[#allocation3 + $0xe0] sm:$0xff]
          %v252 = vld [vmem:[#allocation3 + $0xe8] sm:$0xff]
          %v253 = vld [vmem:[#allocation3 + $0xf0] sm:$0xff]
          %v254 = vld [vmem:[#allocation3 + $0xf8] sm:$0xff]
          %v255 = vld [vmem:[#allocation3 + $0x100] sm:$0xff]
          %v256 = vld [vmem:[#allocation3 + $0x108] sm:$0xff]
          %v257 = vld [vmem:[#allocation3 + $0x110] sm:$0xff]
          %v258 = vld [vmem:[#allocation3 + $0x118] sm:$0xff]
          %v259 = vld [vmem:[#allocation3 + $0x120] sm:$0xff]
          %v260 = vld [vmem:[#allocation3 + $0x128] sm:$0xff]
          %v261 = vld [vmem:[#allocation3 + $0x130] sm:$0xff]
          %v262 = vld [vmem:[#allocation3 + $0x138] sm:$0xff]
          %v263 = vld [vmem:[#allocation3 + $0x140] sm:$0xff]
          %v264 = vld [vmem:[#allocation3 + $0x148] sm:$0xff]
          %v265 = vld [vmem:[#allocation3 + $0x150] sm:$0xff]
          %v266 = vld [vmem:[#allocation3 + $0x158] sm:$0xff]
          %v267 = vld [vmem:[#allocation3 + $0x160] sm:$0xff]
          %v268 = vld [vmem:[#allocation3 + $0x168] sm:$0xff]
          %v269 = vld [vmem:[#allocation3 + $0x170] sm:$0xff]
          %v270 = vld [vmem:[#allocation3 + $0x178] sm:$0xff]
          %v271 = vld [vmem:[#allocation3 + $0x180] sm:$0xff]
          %v272 = vld [vmem:[#allocation3 + $0x188] sm:$0xff]
          %v273 = vld [vmem:[#allocation3 + $0x190] sm:$0xff]
          %v274 = vld [vmem:[#allocation3 + $0x198] sm:$0xff]
          %v275 = vld [vmem:[#allocation3 + $0x1a0] sm:$0xff]
          %v276 = vld [vmem:[#allocation3 + $0x1a8] sm:$0xff]
          %v277 = vld [vmem:[#allocation3 + $0x1b0] sm:$0xff]
          %v278 = vld [vmem:[#allocation3 + $0x1b8] sm:$0xff]
          %v279 = vld [vmem:[#allocation3 + $0x1c0] sm:$0xff]
          %v280 = vld [vmem:[#allocation3 + $0x1c8] sm:$0xff]
          %v281 = vld [vmem:[#allocation3 + $0x1d0] sm:$0xff]
          %v282 = vld [vmem:[#allocation3 + $0x1d8] sm:$0xff]
          %v283 = vld [vmem:[#allocation3 + $0x1e0] sm:$0xff]
          %v284 = vld [vmem:[#allocation3 + $0x1e8] sm:$0xff]
          %v285 = vld [vmem:[#allocation3 + $0x1f0] sm:$0xff]
          %v286 = vld [vmem:[#allocation3 + $0x1f8] sm:$0xff]
          %v287 = vld [vmem:[%s0] sm:$0xff]
          %v288 = vld [vmem:[%s0 + $0x8] sm:$0xff]
          %289 = vmatprep.subr.mxu0 %v254
          %290 = vmatpush1.msra.mxu0 %v253
          %291 = vmatprep.subr.mxu0 %v252
          %292 = vmatpush1.msra.mxu0 %v251
          %293 = vmatprep.subr.mxu0 %v250
          %294 = vmatpush1.msra.mxu0 %v249
          %295 = vmatprep.subr.mxu0 %v248
          %296 = vmatpush1.msra.mxu0 %v247
          %297 = vmatprep.subr.mxu0 %v246
          %298 = vmatpush1.msra.mxu0 %v245
          %299 = vmatprep.subr.mxu0 %v244
          %300 = vmatpush1.msra.mxu0 %v243
          %301 = vmatprep.subr.mxu0 %v242
          %302 = vmatpush1.msra.mxu0 %v241
          %303 = vmatprep.subr.mxu0 %v240
          %304 = vmatpush1.msra.mxu0 %v239
          %305 = vmatprep.subr.mxu0 %v238
          %306 = vmatpush1.msra.mxu0 %v237
          %307 = vmatprep.subr.mxu0 %v236
          %308 = vmatpush1.msra.mxu0 %v235
          %309 = vmatprep.subr.mxu0 %v234
          %310 = vmatpush1.msra.mxu0 %v233
          %311 = vmatprep.subr.mxu0 %v232
          %312 = vmatpush1.msra.mxu0 %v231
          %313 = vmatprep.subr.mxu0 %v230
          %314 = vmatpush1.msra.mxu0 %v229
          %315 = vmatprep.subr.mxu0 %v228
          %316 = vmatpush1.msra.mxu0 %v227
          %317 = vmatprep.subr.mxu0 %v226
          %318 = vmatpush1.msra.mxu0 %v225
          %319 = vmatprep.subr.mxu0 %v224
          %320 = vmatpush1.msra.mxu0 %v223
          %321 = vmatprep.subr.mxu0 %v286
          %322 = vmatpush2.msra.mxu0 %v285
          %323 = vmatprep.subr.mxu0 %v284
          %324 = vmatpush2.msra.mxu0 %v283
          %325 = vmatprep.subr.mxu0 %v282
          %326 = vmatpush2.msra.mxu0 %v281
          %327 = vmatprep.subr.mxu0 %v280
          %328 = vmatpush2.msra.mxu0 %v279
          %329 = vmatprep.subr.mxu0 %v278
          %330 = vmatpush2.msra.mxu0 %v277
          %331 = vmatprep.subr.mxu0 %v276
          %332 = vmatpush2.msra.mxu0 %v275
          %333 = vmatprep.subr.mxu0 %v274
          %334 = vmatpush2.msra.mxu0 %v273
          %335 = vmatprep.subr.mxu0 %v272
          %336 = vmatpush2.msra.mxu0 %v271
          %337 = vmatprep.subr.mxu0 %v270
          %338 = vmatpush2.msra.mxu0 %v269
          %339 = vmatprep.subr.mxu0 %v268
          %340 = vmatpush2.msra.mxu0 %v267
          %341 = vmatprep.subr.mxu0 %v266
          %342 = vmatpush2.msra.mxu0 %v265
          %343 = vmatprep.subr.mxu0 %v264
          %344 = vmatpush2.msra.mxu0 %v263
          %345 = vmatprep.subr.mxu0 %v262
          %346 = vmatpush2.msra.mxu0 %v261
          %347 = vmatprep.subr.mxu0 %v260
          %348 = vmatpush2.msra.mxu0 %v259
          %349 = vmatprep.subr.mxu0 %v258
          %350 = vmatpush2.msra.mxu0 %v257
          %351 = vmatprep.subr.mxu0 %v256
          %352 = vmatpush2.msra.mxu0 %v255
          %353 = vmatprep.mubr.f32.mxu0 %v288
          %354 = vmatmul.mubr.f32.gmra.mxu0 %v287
          %v355 = vpop.f32.mrf.mxu0
          %v356 = vadd.f32 0.0, %v355
          %v357 = vpop.f32.mrf.mxu0
          %v358 = vadd.f32 0.0, %v357
          %359 = vdwg.mxu0
          %v360 = vmul.f32 %v356, 0.5
          %v361 = vmul.f32 %v358, 0.5
          %s362 = sshra.s32 %s218, 7
          %s363 = sand.u32 %s218, 127
          %s364 = smul.addr %s362, 8
          %s365 = scalar_lea.vmem [#allocation2], %s364
          %366 = vst [vmem:[%s365] sm:$0xff] %v360
          %367 = vst [vmem:[%s365 + $0x8] sm:$0xff] %v361
        $region44: #{tpu_custom_call.1} parent=35 // pred_fallthru
          _
        %p368 = scmp.gt.s32.totalorder %s23, 0
        // Predicated region
        $region45: #{tpu_custom_call.1} parent=35 // pred_check
          %p369 = pneg %p368
        $region46: #{tpu_custom_call.1} parent=35 // pred_check_branch
          %371 = sbr.rel (%p369) target = $region48
        $region47: #{tpu_custom_call.1} parent=35 // pred_region
          %v372 = vld [vmem:[#allocation3] sm:$0xff]
          %v373 = vld [vmem:[#allocation3 + $0x8] sm:$0xff]
          %v374 = vld [vmem:[#allocation3 + $0x10] sm:$0xff]
          %v375 = vld [vmem:[#allocation3 + $0x18] sm:$0xff]
          %v376 = vld [vmem:[#allocation3 + $0x20] sm:$0xff]
          %v377 = vld [vmem:[#allocation3 + $0x28] sm:$0xff]
          %v378 = vld [vmem:[#allocation3 + $0x30] sm:$0xff]
          %v379 = vld [vmem:[#allocation3 + $0x38] sm:$0xff]
          %v380 = vld [vmem:[#allocation3 + $0x40] sm:$0xff]
          %v381 = vld [vmem:[#allocation3 + $0x48] sm:$0xff]
          %v382 = vld [vmem:[#allocation3 + $0x50] sm:$0xff]
          %v383 = vld [vmem:[#allocation3 + $0x58] sm:$0xff]
          %v384 = vld [vmem:[#allocation3 + $0x60] sm:$0xff]
          %v385 = vld [vmem:[#allocation3 + $0x68] sm:$0xff]
          %v386 = vld [vmem:[#allocation3 + $0x70] sm:$0xff]
          %v387 = vld [vmem:[#allocation3 + $0x78] sm:$0xff]
          %v388 = vld [vmem:[#allocation3 + $0x80] sm:$0xff]
          %v389 = vld [vmem:[#allocation3 + $0x88] sm:$0xff]
          %v390 = vld [vmem:[#allocation3 + $0x90] sm:$0xff]
          %v391 = vld [vmem:[#allocation3 + $0x98] sm:$0xff]
          %v392 = vld [vmem:[#allocation3 + $0xa0] sm:$0xff]
          %v393 = vld [vmem:[#allocation3 + $0xa8] sm:$0xff]
          %v394 = vld [vmem:[#allocation3 + $0xb0] sm:$0xff]
          %v395 = vld [vmem:[#allocation3 + $0xb8] sm:$0xff]
          %v396 = vld [vmem:[#allocation3 + $0xc0] sm:$0xff]
          %v397 = vld [vmem:[#allocation3 + $0xc8] sm:$0xff]
          %v398 = vld [vmem:[#allocation3 + $0xd0] sm:$0xff]
          %v399 = vld [vmem:[#allocation3 + $0xd8] sm:$0xff]
          %v400 = vld [vmem:[#allocation3 + $0xe0] sm:$0xff]
          %v401 = vld [vmem:[#allocation3 + $0xe8] sm:$0xff]
          %v402 = vld [vmem:[#allocation3 + $0xf0] sm:$0xff]
          %v403 = vld [vmem:[#allocation3 + $0xf8] sm:$0xff]
          %v404 = vld [vmem:[#allocation3 + $0x100] sm:$0xff]
          %v405 = vld [vmem:[#allocation3 + $0x108] sm:$0xff]
          %v406 = vld [vmem:[#allocation3 + $0x110] sm:$0xff]
          %v407 = vld [vmem:[#allocation3 + $0x118] sm:$0xff]
          %v408 = vld [vmem:[#allocation3 + $0x120] sm:$0xff]
          %v409 = vld [vmem:[#allocation3 + $0x128] sm:$0xff]
          %v410 = vld [vmem:[#allocation3 + $0x130] sm:$0xff]
          %v411 = vld [vmem:[#allocation3 + $0x138] sm:$0xff]
          %v412 = vld [vmem:[#allocation3 + $0x140] sm:$0xff]
          %v413 = vld [vmem:[#allocation3 + $0x148] sm:$0xff]
          %v414 = vld [vmem:[#allocation3 + $0x150] sm:$0xff]
          %v415 = vld [vmem:[#allocation3 + $0x158] sm:$0xff]
          %v416 = vld [vmem:[#allocation3 + $0x160] sm:$0xff]
          %v417 = vld [vmem:[#allocation3 + $0x168] sm:$0xff]
          %v418 = vld [vmem:[#allocation3 + $0x170] sm:$0xff]
          %v419 = vld [vmem:[#allocation3 + $0x178] sm:$0xff]
          %v420 = vld [vmem:[#allocation3 + $0x180] sm:$0xff]
          %v421 = vld [vmem:[#allocation3 + $0x188] sm:$0xff]
          %v422 = vld [vmem:[#allocation3 + $0x190] sm:$0xff]
          %v423 = vld [vmem:[#allocation3 + $0x198] sm:$0xff]
          %v424 = vld [vmem:[#allocation3 + $0x1a0] sm:$0xff]
          %v425 = vld [vmem:[#allocation3 + $0x1a8] sm:$0xff]
          %v426 = vld [vmem:[#allocation3 + $0x1b0] sm:$0xff]
          %v427 = vld [vmem:[#allocation3 + $0x1b8] sm:$0xff]
          %v428 = vld [vmem:[#allocation3 + $0x1c0] sm:$0xff]
          %v429 = vld [vmem:[#allocation3 + $0x1c8] sm:$0xff]
          %v430 = vld [vmem:[#allocation3 + $0x1d0] sm:$0xff]
          %v431 = vld [vmem:[#allocation3 + $0x1d8] sm:$0xff]
          %v432 = vld [vmem:[#allocation3 + $0x1e0] sm:$0xff]
          %v433 = vld [vmem:[#allocation3 + $0x1e8] sm:$0xff]
          %v434 = vld [vmem:[#allocation3 + $0x1f0] sm:$0xff]
          %v435 = vld [vmem:[#allocation3 + $0x1f8] sm:$0xff]
          %s436 = ssub.s32 %s23, 1
          %s437 = smul.u32 %s436, 2
          %s438 = smul.addr %s437, 8
          %s439 = scalar_lea.vmem [#allocation2], %s438
          %v440 = vld [vmem:[%s439] sm:$0xff]
          %v441 = vld [vmem:[%s439 + $0x8] sm:$0xff]
          %442 = vmatprep.subr.mxu0 %v403
          %443 = vmatpush1.msra.mxu0 %v402
          %444 = vmatprep.subr.mxu0 %v401
          %445 = vmatpush1.msra.mxu0 %v400
          %446 = vmatprep.subr.mxu0 %v399
          %447 = vmatpush1.msra.mxu0 %v398
          %448 = vmatprep.subr.mxu0 %v397
          %449 = vmatpush1.msra.mxu0 %v396
          %450 = vmatprep.subr.mxu0 %v395
          %451 = vmatpush1.msra.mxu0 %v394
          %452 = vmatprep.subr.mxu0 %v393
          %453 = vmatpush1.msra.mxu0 %v392
          %454 = vmatprep.subr.mxu0 %v391
          %455 = vmatpush1.msra.mxu0 %v390
          %456 = vmatprep.subr.mxu0 %v389
          %457 = vmatpush1.msra.mxu0 %v388
          %458 = vmatprep.subr.mxu0 %v387
          %459 = vmatpush1.msra.mxu0 %v386
          %460 = vmatprep.subr.mxu0 %v385
          %461 = vmatpush1.msra.mxu0 %v384
          %462 = vmatprep.subr.mxu0 %v383
          %463 = vmatpush1.msra.mxu0 %v382
          %464 = vmatprep.subr.mxu0 %v381
          %465 = vmatpush1.msra.mxu0 %v380
          %466 = vmatprep.subr.mxu0 %v379
          %467 = vmatpush1.msra.mxu0 %v378
          %468 = vmatprep.subr.mxu0 %v377
          %469 = vmatpush1.msra.mxu0 %v376
          %470 = vmatprep.subr.mxu0 %v375
          %471 = vmatpush1.msra.mxu0 %v374
          %472 = vmatprep.subr.mxu0 %v373
          %473 = vmatpush1.msra.mxu0 %v372
          %474 = vmatprep.subr.mxu0 %v435
          %475 = vmatpush2.msra.mxu0 %v434
          %476 = vmatprep.subr.mxu0 %v433
          %477 = vmatpush2.msra.mxu0 %v432
          %478 = vmatprep.subr.mxu0 %v431
          %479 = vmatpush2.msra.mxu0 %v430
          %480 = vmatprep.subr.mxu0 %v429
          %481 = vmatpush2.msra.mxu0 %v428
          %482 = vmatprep.subr.mxu0 %v427
          %483 = vmatpush2.msra.mxu0 %v426
          %484 = vmatprep.subr.mxu0 %v425
          %485 = vmatpush2.msra.mxu0 %v424
          %486 = vmatprep.subr.mxu0 %v423
          %487 = vmatpush2.msra.mxu0 %v422
          %488 = vmatprep.subr.mxu0 %v421
          %489 = vmatpush2.msra.mxu0 %v420
          %490 = vmatprep.subr.mxu0 %v419
          %491 = vmatpush2.msra.mxu0 %v418
          %492 = vmatprep.subr.mxu0 %v417
          %493 = vmatpush2.msra.mxu0 %v416
          %494 = vmatprep.subr.mxu0 %v415
          %495 = vmatpush2.msra.mxu0 %v414
          %496 = vmatprep.subr.mxu0 %v413
          %497 = vmatpush2.msra.mxu0 %v412
          %498 = vmatprep.subr.mxu0 %v411
          %499 = vmatpush2.msra.mxu0 %v410
          %500 = vmatprep.subr.mxu0 %v409
          %501 = vmatpush2.msra.mxu0 %v408
          %502 = vmatprep.subr.mxu0 %v407
          %503 = vmatpush2.msra.mxu0 %v406
          %504 = vmatprep.subr.mxu0 %v405
          %505 = vmatpush2.msra.mxu0 %v404
          %506 = vmatprep.mubr.f32.mxu0 %v441
          %507 = vmatmul.mubr.f32.gmra.mxu0 %v440
          %v508 = vpop.f32.mrf.mxu0
          %v509 = vadd.f32 0.0, %v508
          %v510 = vpop.f32.mrf.mxu0
          %v511 = vadd.f32 0.0, %v510
          %512 = vdwg.mxu0
          %p513 = scmp.eq.s32.totalorder %s23, 1
          // Predicated region
          $region49: #{tpu_custom_call.1} parent=47 // pred_check
            %p514 = pneg %p513
          $region50: #{tpu_custom_call.1} parent=47 // pred_check_branch
            %516 = sbr.rel (%p514) target = $region52
          $region51: #{tpu_custom_call.1} parent=47 // pred_region
            %s517 = sshra.s32 %s218, 7
            %s518 = sand.u32 %s218, 127
            %s519 = smul.addr %s517, 8
            %s520 = scalar_lea.vmem %s0, %s519
            %v521 = vld [vmem:[%s520] sm:$0xff]
            %v522 = vld [vmem:[%s520 + $0x8] sm:$0xff]
            %v523 = vsub.f32 %v509, %v521
            %v524 = vsub.f32 %v511, %v522
            %s525 = smul.u32 %s23, 2
            %s526 = sadd.s32 %s517, %s525
            %s527 = smul.addr %s526, 8
            %s528 = scalar_lea.vmem [#allocation2], %s527
            %529 = vst [vmem:[%s528] sm:$0xff] %v523
            %530 = vst [vmem:[%s528 + $0x8] sm:$0xff] %v524
          $region52: #{tpu_custom_call.1} parent=47 // pred_fallthru
            _
          %p531 = scmp.gt.s32.totalorder %s23, 1
          // Predicated region
          $region53: #{tpu_custom_call.1} parent=47 // pred_check
            %p532 = pneg %p531
          $region54: #{tpu_custom_call.1} parent=47 // pred_check_branch
            %534 = sbr.rel (%p532) target = $region56
          $region55: #{tpu_custom_call.1} parent=47 // pred_region
            %s535 = ssub.s32 %s23, 2
            %s536 = sshra.s32 %s218, 7
            %s537 = sand.u32 %s218, 127
            %s538 = smul.u32 %s535, 2
            %s539 = sadd.s32 %s536, %s538
            %s540 = smul.addr %s539, 8
            %s541 = scalar_lea.vmem [#allocation2], %s540
            %v542 = vld [vmem:[%s541] sm:$0xff]
            %v543 = vld [vmem:[%s541 + $0x8] sm:$0xff]
            %v544 = vsub.f32 %v509, %v542
            %v545 = vsub.f32 %v511, %v543
            %s546 = smul.u32 %s23, 2
            %s547 = sadd.s32 %s536, %s546
            %s548 = smul.addr %s547, 8
            %s549 = scalar_lea.vmem [#allocation2], %s548
            %550 = vst [vmem:[%s549] sm:$0xff] %v544
            %551 = vst [vmem:[%s549 + $0x8] sm:$0xff] %v545
          $region56: #{tpu_custom_call.1} parent=47 // pred_fallthru
            _
        $region48: #{tpu_custom_call.1} parent=35 // pred_fallthru
          _
        %p552 = scmp.eq.s32.totalorder %s23, 1
        // Predicated region
        $region57: #{tpu_custom_call.1} parent=35 // pred_check
          %p553 = pneg %p552
        $region58: #{tpu_custom_call.1} parent=35 // pred_check_branch
          %555 = sbr.rel (%p553) target = $region60
        $region59: #{tpu_custom_call.1} parent=35 // pred_region
          %v556 = vld [vmem:[%s2] sm:$0xff]
          %v557 = vld [vmem:[%s2 + $0x8] sm:$0xff]
          %s558 = sshra.s32 %s218, 7
          %s559 = sand.u32 %s218, 127
          %s560 = smul.addr %s558, 8
          %s561 = scalar_lea.vmem %s0, %s560
          %v562 = vld [vmem:[%s561] sm:$0xff]
          %v563 = vld [vmem:[%s561 + $0x8] sm:$0xff]
          %s564 = scalar_lea.vmem %s2, 16
          %v565 = vld [vmem:[%s564] sm:$0xff]
          %v566 = vld [vmem:[%s564 + $0x8] sm:$0xff]
          %s567 = smul.addr %s558, 8
          %s568 = scalar_lea.vmem [#allocation2], %s567
          %v569 = vld [vmem:[%s568] sm:$0xff]
          %v570 = vld [vmem:[%s568 + $0x8] sm:$0xff]
          %vm571 = vcmask 64512
          %v573 = vsel %vm571, %v565, 0
          %v576 = vsel %vm571, %v566, 0
          %578 = vmatprep.subr.mxu0 0.0
          %579 = vmatpush1.msra.mxu0 0.0
          %580 = vmatprep.subr.mxu0 0.0
          %581 = vmatpush1.msra.mxu0 0.0
          %582 = vmatprep.subr.mxu0 0.0
          %583 = vmatpush1.msra.mxu0 0.0
          %584 = vmatprep.subr.mxu0 0.0
          %585 = vmatpush1.msra.mxu0 0.0
          %586 = vmatprep.subr.mxu0 0.0
          %587 = vmatpush1.msra.mxu0 0.0
          %588 = vmatprep.subr.mxu0 0.0
          %589 = vmatpush1.msra.mxu0 0.0
          %590 = vmatprep.subr.mxu0 0.0
          %591 = vmatpush1.msra.mxu0 0.0
          %592 = vmatprep.subr.mxu0 0.0
          %593 = vmatpush1.msra.mxu0 0.0
          %594 = vmatprep.subr.mxu0 0.0
          %595 = vmatpush1.msra.mxu0 0.0
          %596 = vmatprep.subr.mxu0 0.0
          %597 = vmatpush1.msra.mxu0 0.0
          %598 = vmatprep.subr.mxu0 0.0
          %599 = vmatpush1.msra.mxu0 0.0
          %600 = vmatprep.subr.mxu0 0.0
          %601 = vmatpush1.msra.mxu0 0.0
          %602 = vmatprep.subr.mxu0 0.0
          %603 = vmatpush1.msra.mxu0 0.0
          %604 = vmatprep.subr.mxu0 0.0
          %605 = vmatpush1.msra.mxu0 0.0
          %606 = vmatprep.subr.mxu0 0.0
          %607 = vmatpush1.msra.mxu0 0.0
          %608 = vmatprep.subr.mxu0 %v570
          %609 = vmatpush1.msra.mxu0 %v569
          %610 = vmatprep.subr.mxu0 0.0
          %611 = vmatpush2.msra.mxu0 0.0
          %612 = vmatprep.subr.mxu0 0.0
          %613 = vmatpush2.msra.mxu0 0.0
          %614 = vmatprep.subr.mxu0 0.0
          %615 = vmatpush2.msra.mxu0 0.0
          %616 = vmatprep.subr.mxu0 0.0
          %617 = vmatpush2.msra.mxu0 0.0
          %618 = vmatprep.subr.mxu0 0.0
          %619 = vmatpush2.msra.mxu0 0.0
          %620 = vmatprep.subr.mxu0 0.0
          %621 = vmatpush2.msra.mxu0 0.0
          %622 = vmatprep.subr.mxu0 0.0
          %623 = vmatpush2.msra.mxu0 0.0
          %624 = vmatprep.subr.mxu0 0.0
          %625 = vmatpush2.msra.mxu0 0.0
          %626 = vmatprep.subr.mxu0 0.0
          %627 = vmatpush2.msra.mxu0 0.0
          %628 = vmatprep.subr.mxu0 0.0
          %629 = vmatpush2.msra.mxu0 0.0
          %630 = vmatprep.subr.mxu0 0.0
          %631 = vmatpush2.msra.mxu0 0.0
          %632 = vmatprep.subr.mxu0 0.0
          %633 = vmatpush2.msra.mxu0 0.0
          %634 = vmatprep.subr.mxu0 0.0
          %635 = vmatpush2.msra.mxu0 0.0
          %636 = vmatprep.subr.mxu0 0.0
          %637 = vmatpush2.msra.mxu0 0.0
          %638 = vmatprep.subr.mxu0 0.0
          %639 = vmatpush2.msra.mxu0 0.0
          %640 = vmatprep.subr.mxu0 0.0
          %641 = vmatpush2.msra.mxu0 0.0
          %642 = vmatprep.mubr.f32.mxu0 0.0
          %643 = vmatmul.mubr.f32.gmra.mxu0 %v573
          %v644 = vpop.f32.mrf.mxu0
          %v645 = vadd.f32 0.0, %v644
          %v646 = vpop.f32.mrf.mxu0
          %v647 = vadd.f32 0.0, %v646
          %648 = vmatprep.mubr.f32.mxu0 0.0
          %649 = vmatmul.mubr.f32.gmra.mxu0 %v576
          %v650 = vpop.f32.mrf.mxu0
          %v651 = vadd.f32 0.0, %v650
          %v652 = vpop.f32.mrf.mxu0
          %v653 = vadd.f32 0.0, %v652
          %654 = vdwg.mxu0
          %v656 = vsel %vm571, %v556, 0
          %v659 = vsel %vm571, %v557, 0
          %661 = vmatprep.subr.mxu0 0.0
          %662 = vmatpush1.msra.mxu0 0.0
          %663 = vmatprep.subr.mxu0 0.0
          %664 = vmatpush1.msra.mxu0 0.0
          %665 = vmatprep.subr.mxu0 0.0
          %666 = vmatpush1.msra.mxu0 0.0
          %667 = vmatprep.subr.mxu0 0.0
          %668 = vmatpush1.msra.mxu0 0.0
          %669 = vmatprep.subr.mxu0 0.0
          %670 = vmatpush1.msra.mxu0 0.0
          %671 = vmatprep.subr.mxu0 0.0
          %672 = vmatpush1.msra.mxu0 0.0
          %673 = vmatprep.subr.mxu0 0.0
          %674 = vmatpush1.msra.mxu0 0.0
          %675 = vmatprep.subr.mxu0 0.0
          %676 = vmatpush1.msra.mxu0 0.0
          %677 = vmatprep.subr.mxu0 0.0
          %678 = vmatpush1.msra.mxu0 0.0
          %679 = vmatprep.subr.mxu0 0.0
          %680 = vmatpush1.msra.mxu0 0.0
          %681 = vmatprep.subr.mxu0 0.0
          %682 = vmatpush1.msra.mxu0 0.0
          %683 = vmatprep.subr.mxu0 0.0
          %684 = vmatpush1.msra.mxu0 0.0
          %685 = vmatprep.subr.mxu0 0.0
          %686 = vmatpush1.msra.mxu0 0.0
          %687 = vmatprep.subr.mxu0 0.0
          %688 = vmatpush1.msra.mxu0 0.0
          %689 = vmatprep.subr.mxu0 0.0
          %690 = vmatpush1.msra.mxu0 0.0
          %691 = vmatprep.subr.mxu0 %v563
          %692 = vmatpush1.msra.mxu0 %v562
          %693 = vmatprep.subr.mxu0 0.0
          %694 = vmatpush2.msra.mxu0 0.0
          %695 = vmatprep.subr.mxu0 0.0
          %696 = vmatpush2.msra.mxu0 0.0
          %697 = vmatprep.subr.mxu0 0.0
          %698 = vmatpush2.msra.mxu0 0.0
          %699 = vmatprep.subr.mxu0 0.0
          %700 = vmatpush2.msra.mxu0 0.0
          %701 = vmatprep.subr.mxu0 0.0
          %702 = vmatpush2.msra.mxu0 0.0
          %703 = vmatprep.subr.mxu0 0.0
          %704 = vmatpush2.msra.mxu0 0.0
          %705 = vmatprep.subr.mxu0 0.0
          %706 = vmatpush2.msra.mxu0 0.0
          %707 = vmatprep.subr.mxu0 0.0
          %708 = vmatpush2.msra.mxu0 0.0
          %709 = vmatprep.subr.mxu0 0.0
          %710 = vmatpush2.msra.mxu0 0.0
          %711 = vmatprep.subr.mxu0 0.0
          %712 = vmatpush2.msra.mxu0 0.0
          %713 = vmatprep.subr.mxu0 0.0
          %714 = vmatpush2.msra.mxu0 0.0
          %715 = vmatprep.subr.mxu0 0.0
          %716 = vmatpush2.msra.mxu0 0.0
          %717 = vmatprep.subr.mxu0 0.0
          %718 = vmatpush2.msra.mxu0 0.0
          %719 = vmatprep.subr.mxu0 0.0
          %720 = vmatpush2.msra.mxu0 0.0
          %721 = vmatprep.subr.mxu0 0.0
          %722 = vmatpush2.msra.mxu0 0.0
          %723 = vmatprep.subr.mxu0 0.0
          %724 = vmatpush2.msra.mxu0 0.0
          %725 = vmatprep.mubr.f32.mxu0 0.0
          %726 = vmatmul.mubr.f32.gmra.mxu0 %v656
          %v727 = vpop.f32.mrf.mxu0
          %v728 = vadd.f32 %v645, %v727
          %v729 = vpop.f32.mrf.mxu0
          %v730 = vadd.f32 %v647, %v729
          %731 = vmatprep.mubr.f32.mxu0 0.0
          %732 = vmatmul.mubr.f32.gmra.mxu0 %v659
          %v733 = vpop.f32.mrf.mxu0
          %v734 = vadd.f32 %v651, %v733
          %v735 = vpop.f32.mrf.mxu0
          %v736 = vadd.f32 %v653, %v735
          %737 = vdwg.mxu0
          %s738 = scalar_lea.vmem %s2, 32
          %v739 = vld [vmem:[%s738] sm:$0xff]
          %v740 = vld [vmem:[%s738 + $0x8] sm:$0xff]
          %s741 = sadd.s32 %s558, 2
          %s742 = smul.addr %s741, 8
          %s743 = scalar_lea.vmem [#allocation2], %s742
          %v744 = vld [vmem:[%s743] sm:$0xff]
          %v745 = vld [vmem:[%s743 + $0x8] sm:$0xff]
          %v747 = vsel %vm571, %v739, 0
          %v750 = vsel %vm571, %v740, 0
          %752 = vmatprep.subr.mxu0 0.0
          %753 = vmatpush1.msra.mxu0 0.0
          %754 = vmatprep.subr.mxu0 0.0
          %755 = vmatpush1.msra.mxu0 0.0
          %756 = vmatprep.subr.mxu0 0.0
          %757 = vmatpush1.msra.mxu0 0.0
          %758 = vmatprep.subr.mxu0 0.0
          %759 = vmatpush1.msra.mxu0 0.0
          %760 = vmatprep.subr.mxu0 0.0
          %761 = vmatpush1.msra.mxu0 0.0
          %762 = vmatprep.subr.mxu0 0.0
          %763 = vmatpush1.msra.mxu0 0.0
          %764 = vmatprep.subr.mxu0 0.0
          %765 = vmatpush1.msra.mxu0 0.0
          %766 = vmatprep.subr.mxu0 0.0
          %767 = vmatpush1.msra.mxu0 0.0
          %768 = vmatprep.subr.mxu0 0.0
          %769 = vmatpush1.msra.mxu0 0.0
          %770 = vmatprep.subr.mxu0 0.0
          %771 = vmatpush1.msra.mxu0 0.0
          %772 = vmatprep.subr.mxu0 0.0
          %773 = vmatpush1.msra.mxu0 0.0
          %774 = vmatprep.subr.mxu0 0.0
          %775 = vmatpush1.msra.mxu0 0.0
          %776 = vmatprep.subr.mxu0 0.0
          %777 = vmatpush1.msra.mxu0 0.0
          %778 = vmatprep.subr.mxu0 0.0
          %779 = vmatpush1.msra.mxu0 0.0
          %780 = vmatprep.subr.mxu0 0.0
          %781 = vmatpush1.msra.mxu0 0.0
          %782 = vmatprep.subr.mxu0 %v745
          %783 = vmatpush1.msra.mxu0 %v744
          %784 = vmatprep.subr.mxu0 0.0
          %785 = vmatpush2.msra.mxu0 0.0
          %786 = vmatprep.subr.mxu0 0.0
          %787 = vmatpush2.msra.mxu0 0.0
          %788 = vmatprep.subr.mxu0 0.0
          %789 = vmatpush2.msra.mxu0 0.0
          %790 = vmatprep.subr.mxu0 0.0
          %791 = vmatpush2.msra.mxu0 0.0
          %792 = vmatprep.subr.mxu0 0.0
          %793 = vmatpush2.msra.mxu0 0.0
          %794 = vmatprep.subr.mxu0 0.0
          %795 = vmatpush2.msra.mxu0 0.0
          %796 = vmatprep.subr.mxu0 0.0
          %797 = vmatpush2.msra.mxu0 0.0
          %798 = vmatprep.subr.mxu0 0.0
          %799 = vmatpush2.msra.mxu0 0.0
          %800 = vmatprep.subr.mxu0 0.0
          %801 = vmatpush2.msra.mxu0 0.0
          %802 = vmatprep.subr.mxu0 0.0
          %803 = vmatpush2.msra.mxu0 0.0
          %804 = vmatprep.subr.mxu0 0.0
          %805 = vmatpush2.msra.mxu0 0.0
          %806 = vmatprep.subr.mxu0 0.0
          %807 = vmatpush2.msra.mxu0 0.0
          %808 = vmatprep.subr.mxu0 0.0
          %809 = vmatpush2.msra.mxu0 0.0
          %810 = vmatprep.subr.mxu0 0.0
          %811 = vmatpush2.msra.mxu0 0.0
          %812 = vmatprep.subr.mxu0 0.0
          %813 = vmatpush2.msra.mxu0 0.0
          %814 = vmatprep.subr.mxu0 0.0
          %815 = vmatpush2.msra.mxu0 0.0
          %816 = vmatprep.mubr.f32.mxu0 0.0
          %817 = vmatmul.mubr.f32.gmra.mxu0 %v747
          %v818 = vpop.f32.mrf.mxu0
          %v819 = vadd.f32 0.0, %v818
          %v820 = vpop.f32.mrf.mxu0
          %v821 = vadd.f32 0.0, %v820
          %822 = vmatprep.mubr.f32.mxu0 0.0
          %823 = vmatmul.mubr.f32.gmra.mxu0 %v750
          %v824 = vpop.f32.mrf.mxu0
          %v825 = vadd.f32 0.0, %v824
          %v826 = vpop.f32.mrf.mxu0
          %v827 = vadd.f32 0.0, %v826
          %828 = vdwg.mxu0
          %v829 = vadd.f32 %v728, %v819
          %v830 = vadd.f32 %v730, %v821
          %v831 = vadd.f32 %v734, %v825
          %v832 = vadd.f32 %v736, %v827
          %v833 = vld [vmem:[%s3] sm:$0xff]
          %v834 = vld [vmem:[%s3 + $0x8] sm:$0xff]
          %836 = vset.pattern.permute.xlu0 0
          %837 = vperm.xlu0 %836, %v833
          %v838 = vpop.permute.xlu0 %837
          %841 = vset.pattern.permute.xlu0 0
          %842 = vperm.xlu0 %841, %v834
          %v843 = vpop.permute.xlu0 %842
          %v845 = vadd.f32 %v829, %v838
          %v846 = vadd.f32 %v830, %v838
          %v847 = vadd.f32 %v831, %v843
          %v848 = vadd.f32 %v832, %v843
          %849 = vst [vmem:[%s214] sm:$0xff] %v845
          %850 = vst [vmem:[%s214 + $0x8] sm:$0xff] %v846
          %851 = vst [vmem:[%s214 + $0x10] sm:$0xff] %v847
          %852 = vst [vmem:[%s214 + $0x18] sm:$0xff] %v848
        $region60: #{tpu_custom_call.1} parent=35 // pred_fallthru
          _
        %s853 = sand.u32 %s132, 1
        %s854 = scalar_lea.sflag [#allocation5], %s853
        %s855 = sand.u32 %s132, 1
        %s856 = smul.addr %s855, 32
        %s857 = scalar_lea.vmem [#allocation6], %s856
        // Predicated region
        $region61: #{tpu_custom_call.1} parent=35 // pred_check
          %p858 = pneg %p142
        $region62: #{tpu_custom_call.1} parent=35 // pred_check_branch
          %860 = sbr.rel (%p858) target = $region64
        $region63: #{tpu_custom_call.1} parent=35 // pred_region
          %p861 = scmp.eq.s32.totalorder %s23, 1
          %s862 = scalar_select %p861, %s24, 0
          %s863 = smul.u32 2, %s862
          %s865 = ssub.s32 512, 512
          %866 = vsyncadd %s854, %s865
          %s867 = smul.addr %s863, 128
          %s868 = scalar_lea.hbm %s4, %s867
          %s869 = sshll.u32 %s857, 4
          %s870 = int_to_ptr.vmem [resolvable:$true] %s869
          %875 = dma.vmem_to_hbm [thread:$0]  %s870, 512, %s868, %s854, 256, 256, 16
        $region64: #{tpu_custom_call.1} parent=35 // pred_fallthru
          _
      $region36: #{tpu_custom_call.1} parent=5 // pred_fallthru
        _
      %p876 = scmp.le.s32.totalorder 2, %s14
      // Predicated region
      $region65: #{tpu_custom_call.1} parent=5 // pred_check
        %p877 = pneg %p876
      $region66: #{tpu_custom_call.1} parent=5 // pred_check_branch
        %879 = sbr.rel (%p877) target = $region68
      $region67: #{tpu_custom_call.1} parent=5 // pred_region
        %s880 = ssub.s32 %s14, 2
        // Predicated region
        $region69: #{tpu_custom_call.1} parent=67 // pred_check
          %p881 = pneg %p148
        $region70: #{tpu_custom_call.1} parent=67 // pred_check_branch
          %883 = sbr.rel (%p881) target = $region72
        $region71: #{tpu_custom_call.1} parent=67 // pred_region
          %s884 = sand.u32 %s133, 1
          %s885 = scalar_lea.sflag [#allocation5], %s884
          %s886 = sand.u32 %s133, 1
          %s887 = smul.addr %s886, 32
          %s888 = scalar_lea.vmem [#allocation6], %s887
          %889 = dma.done %s885, 512
        $region72: #{tpu_custom_call.1} parent=67 // pred_fallthru
          _
      $region68: #{tpu_custom_call.1} parent=5 // pred_fallthru
        _
    $region6: #{tpu_custom_call.1} parent=1 // loop_footer
      %s18 = sadd.s32 1, %s14
    $region7: #{tpu_custom_call.1} parent=1 // loop_footer_branch
      %13 = sbr.rel target = $region3
    $region8: #{tpu_custom_call.1} parent=1 // loop_exit
      _
    %890 = vsyncpa [#allocation4], 1
    %s891 = scalar_lea.sflag [#allocation4], 1
    %892 = vsyncpa %s891, 1
    %893 = vsyncpa [#allocation5], 1
    %s894 = scalar_lea.sflag [#allocation5], 1
    %895 = vsyncpa %s894, 1

</llo_original>
